<compile_context>
chip_gen: v5e
topology: v5e:2x2
jax: 0.10.0
libtpu: 0.0.40
codegen_flags: <defaults>
</compile_context>

<pallas_src>
import jax
import jax.numpy as jnp
from jax.experimental import pallas as pl
from jax.experimental.pallas import tpu as pltpu


def stacked_attention_kernel(v_ref, u_ref, wv_ref, bv_ref, wu_ref, bu_ref,
                             wp_ref, bp_ref, out_ref):
    v = v_ref[...]           # (B, D, HW)   channels on sublanes, space on lanes
    u = u_ref[...]           # (B, D, 1)
    wv = wv_ref[...]         # (K, D)
    wu = wu_ref[...]         # (K, D)
    bv = bv_ref[...]         # (K, 1)
    bu = bu_ref[...]         # (K, 1)
    wp = wp_ref[...]         # (1, K)
    bp = bp_ref[...]         # (1, 1)

    B, D, HW = v.shape
    bias = bv + bu           # (K, 1), shared across space and batch

    for b in range(B):       # B is small & static -> unrolled
        vb = v[b]            # (D, HW)
        ub = u[b]            # (D, 1)

        # Wv(v) + Wu(u) + biases as D broadcast-FMAs on the VPU
        # (contraction depth D=4 is too shallow to be worth the MXU).
        t = bias                                              # (K, 1)
        for d in range(D):
            t = t + wv[:, d:d + 1] * vb[d:d + 1, :] \
                  + wu[:, d:d + 1] * ub[d:d + 1, :]           # -> (K, HW)

        h = jnp.tanh(t)                                       # (K, HW)

        # Wp: K -> 1, then softmax over the spatial (lane) axis.
        logits = jnp.dot(wp, h,
                         preferred_element_type=jnp.float32) + bp   # (1, HW)
        m = jnp.max(logits, axis=1, keepdims=True)                   # (1, 1)
        e = jnp.exp(logits - m)                                      # (1, HW)
        denom = jnp.sum(e, axis=1, keepdims=True)                    # (1, 1)
        p = e * pl.reciprocal(denom, approx=True)                    # (1, HW)

        # Attention-weighted pooling over space (cheap lane reduction of
        # D=4 rows in this layout) + residual.
        v_tilde = jnp.sum(vb * p, axis=1, keepdims=True)             # (D, 1)
        out_ref[b] = ub + v_tilde                                    # (D, 1)


def _pick_block_n(n, max_b=8):
    """Largest divisor of n that is <= max_b while keeping >= 2 grid steps."""
    best = 1
    for cand in range(1, min(max_b, n) + 1):
        if n % cand == 0 and n // cand >= min(2, n):
            best = cand
    return best


def stacked_attention(v, u, params, block_n=None):
    """v: (N, D, H, W) float32, u: (N, D) float32 -> next_u: (N, D)."""
    N, D, H, W = v.shape
    K = params["wv"].shape[0]
    HW = H * W

    B = _pick_block_n(N) if block_n is None else block_n
    assert N % B == 0, "batch block size must divide N"

    # Pure reshapes only — no HBM-copying relayout of v.
    v_flat = v.reshape(N, D, HW)
    u3 = u.reshape(N, D, 1)
    wv = params["wv"]                       # (K, D)
    wu = params["wu"]                       # (K, D)
    wp = params["wp"].reshape(1, K)         # (1, K)
    bv = params["bv"].reshape(K, 1)
    bu = params["bu"].reshape(K, 1)
    bp = params["bp"].reshape(1, 1)

    grid_spec = pltpu.PrefetchScalarGridSpec(
        num_scalar_prefetch=0,
        grid=(N // B,),
        in_specs=[
            pl.BlockSpec((B, D, HW), lambda i: (i, 0, 0)),   # v, B elems/step
            pl.BlockSpec((B, D, 1), lambda i: (i, 0, 0)),    # u
            pl.BlockSpec((K, D), lambda i: (0, 0)),          # Wv
            pl.BlockSpec((K, 1), lambda i: (0, 0)),          # bv
            pl.BlockSpec((K, D), lambda i: (0, 0)),          # Wu
            pl.BlockSpec((K, 1), lambda i: (0, 0)),          # bu
            pl.BlockSpec((1, K), lambda i: (0, 0)),          # Wp
            pl.BlockSpec((1, 1), lambda i: (0, 0)),          # bp
        ],
        out_specs=pl.BlockSpec((B, D, 1), lambda i: (i, 0, 0)),
    )

    out = pl.pallas_call(
        stacked_attention_kernel,
        out_shape=jax.ShapeDtypeStruct((N, D, 1), jnp.float32),
        grid_spec=grid_spec,
        compiler_params=pltpu.CompilerParams(
            dimension_semantics=("parallel",)),
    )(v_flat, u3, wv, bv, wu, bu, wp, bp)
    return out.reshape(N, D)


def stacked_attention_reference(v, u, params):
    """Pure-JAX mirror of the PyTorch forward (for verification)."""
    N, D, H, W = v.shape
    v_flat = jnp.transpose(v, (0, 2, 3, 1)).reshape(N, H * W, D)
    v_proj = jnp.einsum('nsd,kd->nsk', v_flat, params["wv"]) + params["bv"]
    u_proj = u @ params["wu"].T + params["bu"]
    h = jnp.tanh(v_proj + u_proj[:, None, :])
    logits = jnp.einsum('nsk,ok->nso', h, params["wp"])[..., 0] + params["bp"][0]
    p = jax.nn.softmax(logits, axis=1)
    v_tilde = jnp.einsum('ns,nsd->nd', p, v_flat)
    return u + v_tilde


def init_params(key, input_dim, hidden_dim):
    ks = jax.random.split(key, 6)
    return {
        # Conv2d(input_dim, hidden_dim, 1): weight (K, D, 1, 1) -> stored as (K, D)
        "wv": 0.1 * jax.random.normal(ks[0], (hidden_dim, input_dim), jnp.float32),
        "bv": 0.1 * jax.random.normal(ks[1], (hidden_dim,), jnp.float32),
        # Linear(input_dim, hidden_dim): weight (K, D)
        "wu": 0.1 * jax.random.normal(ks[2], (hidden_dim, input_dim), jnp.float32),
        "bu": 0.1 * jax.random.normal(ks[3], (hidden_dim,), jnp.float32),
        # Conv2d(hidden_dim, 1, 1): weight (1, K, 1, 1) -> stored as (1, K)
        "wp": 0.1 * jax.random.normal(ks[4], (1, hidden_dim), jnp.float32),
        "bp": 0.1 * jax.random.normal(ks[5], (1,), jnp.float32),
    }


if __name__ == "__main__":
    N, D, H, W = 2, 4, 16, 16     # batch, input channels, spatial
    K = 32                        # hidden_dim

    key = jax.random.PRNGKey(0)
    kv, ku, kp = jax.random.split(key, 3)
    v = jax.random.normal(kv, (N, D, H, W), jnp.float32)
    u = jax.random.normal(ku, (N, D), jnp.float32)
    params = init_params(kp, D, K)

    out = stacked_attention(v, u, params)
    out = jax.block_until_ready(out)

    ref = stacked_attention_reference(v, u, params)
    assert out.shape == (N, D)
    # Tolerance loosened vs 1e-5 because the softmax denominator uses the
    # EUP approximate reciprocal (pl.reciprocal(..., approx=True)).
    assert jnp.allclose(out, ref, atol=5e-3, rtol=5e-3), "mismatch vs reference"

    print("KERNEL_OK")
</pallas_src>

<mosaic_0001>
module attributes {stable_mosaic.version = 11 : i64} {
  func.func @stacked_attention_kernel(%arg0: i32, %arg1: memref<1x4x256xf32, #tpu.memory_space<vmem>>, %arg2: memref<1x4x1xf32, #tpu.memory_space<vmem>>, %arg3: memref<32x4xf32, #tpu.memory_space<vmem>>, %arg4: memref<32x1xf32, #tpu.memory_space<vmem>>, %arg5: memref<32x4xf32, #tpu.memory_space<vmem>>, %arg6: memref<32x1xf32, #tpu.memory_space<vmem>>, %arg7: memref<1x32xf32, #tpu.memory_space<vmem>>, %arg8: memref<1x1xf32, #tpu.memory_space<vmem>>, %arg9: memref<1x4x1xf32, #tpu.memory_space<vmem>>) attributes {dimension_semantics = [#tpu.dimension_semantics<parallel>], iteration_bounds = array<i64: 2>, scalar_prefetch = 0 : i64, scratch_operands = 0 : i64, tpu.core_type = #tpu.core_type<tc>, window_params = [{transform_indices = @transform_0, window_bounds = array<i64: 1, 4, 256>}, {transform_indices = @transform_1, window_bounds = array<i64: 1, 4, 1>}, {pipeline_mode = #tpu.pipeline_mode<synchronous>, transform_indices = @transform_2, window_bounds = array<i64: 32, 4>}, {pipeline_mode = #tpu.pipeline_mode<synchronous>, transform_indices = @transform_3, window_bounds = array<i64: 32, 1>}, {pipeline_mode = #tpu.pipeline_mode<synchronous>, transform_indices = @transform_4, window_bounds = array<i64: 32, 4>}, {pipeline_mode = #tpu.pipeline_mode<synchronous>, transform_indices = @transform_5, window_bounds = array<i64: 32, 1>}, {pipeline_mode = #tpu.pipeline_mode<synchronous>, transform_indices = @transform_6, window_bounds = array<i64: 1, 32>}, {pipeline_mode = #tpu.pipeline_mode<synchronous>, transform_indices = @transform_7, window_bounds = array<i64: 1, 1>}, {transform_indices = @transform_8, window_bounds = array<i64: 1, 4, 1>}]} {
    %c0 = arith.constant 0 : index
    %c0_0 = arith.constant 0 : index
    %c0_1 = arith.constant 0 : index
    %0 = vector.load %arg1[%c0, %c0_0, %c0_1] : memref<1x4x256xf32, #tpu.memory_space<vmem>>, vector<1x4x256xf32>
    %c0_2 = arith.constant 0 : index
    %c0_3 = arith.constant 0 : index
    %c0_4 = arith.constant 0 : index
    %1 = vector.load %arg2[%c0_2, %c0_3, %c0_4] : memref<1x4x1xf32, #tpu.memory_space<vmem>>, vector<1x4x1xf32>
    %c0_5 = arith.constant 0 : index
    %c0_6 = arith.constant 0 : index
    %2 = vector.load %arg3[%c0_5, %c0_6] : memref<32x4xf32, #tpu.memory_space<vmem>>, vector<32x4xf32>
    %c0_7 = arith.constant 0 : index
    %c0_8 = arith.constant 0 : index
    %3 = vector.load %arg5[%c0_7, %c0_8] : memref<32x4xf32, #tpu.memory_space<vmem>>, vector<32x4xf32>
    %c0_9 = arith.constant 0 : index
    %c0_10 = arith.constant 0 : index
    %4 = vector.load %arg4[%c0_9, %c0_10] : memref<32x1xf32, #tpu.memory_space<vmem>>, vector<32x1xf32>
    %c0_11 = arith.constant 0 : index
    %c0_12 = arith.constant 0 : index
    %5 = vector.load %arg6[%c0_11, %c0_12] : memref<32x1xf32, #tpu.memory_space<vmem>>, vector<32x1xf32>
    %c0_13 = arith.constant 0 : index
    %c0_14 = arith.constant 0 : index
    %6 = vector.load %arg7[%c0_13, %c0_14] : memref<1x32xf32, #tpu.memory_space<vmem>>, vector<1x32xf32>
    %c0_15 = arith.constant 0 : index
    %c0_16 = arith.constant 0 : index
    %7 = vector.load %arg8[%c0_15, %c0_16] : memref<1x1xf32, #tpu.memory_space<vmem>>, vector<1x1xf32>
    %8 = arith.addf %4, %5 : vector<32x1xf32>
    %9 = vector.shape_cast %0 : vector<1x4x256xf32> to vector<4x256xf32>
    %10 = vector.shape_cast %1 : vector<1x4x1xf32> to vector<4x1xf32>
    %11 = vector.extract_strided_slice %2 {offsets = [0, 0], sizes = [32, 1], strides = [1, 1]} : vector<32x4xf32> to vector<32x1xf32>
    %12 = vector.extract_strided_slice %9 {offsets = [0, 0], sizes = [1, 256], strides = [1, 1]} : vector<4x256xf32> to vector<1x256xf32>
    %13 = vector.broadcast %11 : vector<32x1xf32> to vector<32x256xf32>
    %14 = vector.broadcast %12 : vector<1x256xf32> to vector<32x256xf32>
    %15 = arith.mulf %13, %14 : vector<32x256xf32>
    %16 = vector.broadcast %8 : vector<32x1xf32> to vector<32x256xf32>
    %17 = arith.addf %16, %15 : vector<32x256xf32>
    %18 = vector.extract_strided_slice %3 {offsets = [0, 0], sizes = [32, 1], strides = [1, 1]} : vector<32x4xf32> to vector<32x1xf32>
    %19 = vector.extract_strided_slice %10 {offsets = [0, 0], sizes = [1, 1], strides = [1, 1]} : vector<4x1xf32> to vector<1x1xf32>
    %20 = vector.broadcast %19 : vector<1x1xf32> to vector<32x1xf32>
    %21 = arith.mulf %18, %20 : vector<32x1xf32>
    %22 = vector.broadcast %21 : vector<32x1xf32> to vector<32x256xf32>
    %23 = arith.addf %17, %22 : vector<32x256xf32>
    %24 = vector.extract_strided_slice %2 {offsets = [0, 1], sizes = [32, 1], strides = [1, 1]} : vector<32x4xf32> to vector<32x1xf32>
    %25 = vector.extract_strided_slice %9 {offsets = [1, 0], sizes = [1, 256], strides = [1, 1]} : vector<4x256xf32> to vector<1x256xf32>
    %26 = vector.broadcast %24 : vector<32x1xf32> to vector<32x256xf32>
    %27 = vector.broadcast %25 : vector<1x256xf32> to vector<32x256xf32>
    %28 = arith.mulf %26, %27 : vector<32x256xf32>
    %29 = arith.addf %23, %28 : vector<32x256xf32>
    %30 = vector.extract_strided_slice %3 {offsets = [0, 1], sizes = [32, 1], strides = [1, 1]} : vector<32x4xf32> to vector<32x1xf32>
    %31 = vector.extract_strided_slice %10 {offsets = [1, 0], sizes = [1, 1], strides = [1, 1]} : vector<4x1xf32> to vector<1x1xf32>
    %32 = vector.broadcast %31 : vector<1x1xf32> to vector<32x1xf32>
    %33 = arith.mulf %30, %32 : vector<32x1xf32>
    %34 = vector.broadcast %33 : vector<32x1xf32> to vector<32x256xf32>
    %35 = arith.addf %29, %34 : vector<32x256xf32>
    %36 = vector.extract_strided_slice %2 {offsets = [0, 2], sizes = [32, 1], strides = [1, 1]} : vector<32x4xf32> to vector<32x1xf32>
    %37 = vector.extract_strided_slice %9 {offsets = [2, 0], sizes = [1, 256], strides = [1, 1]} : vector<4x256xf32> to vector<1x256xf32>
    %38 = vector.broadcast %36 : vector<32x1xf32> to vector<32x256xf32>
    %39 = vector.broadcast %37 : vector<1x256xf32> to vector<32x256xf32>
    %40 = arith.mulf %38, %39 : vector<32x256xf32>
    %41 = arith.addf %35, %40 : vector<32x256xf32>
    %42 = vector.extract_strided_slice %3 {offsets = [0, 2], sizes = [32, 1], strides = [1, 1]} : vector<32x4xf32> to vector<32x1xf32>
    %43 = vector.extract_strided_slice %10 {offsets = [2, 0], sizes = [1, 1], strides = [1, 1]} : vector<4x1xf32> to vector<1x1xf32>
    %44 = vector.broadcast %43 : vector<1x1xf32> to vector<32x1xf32>
    %45 = arith.mulf %42, %44 : vector<32x1xf32>
    %46 = vector.broadcast %45 : vector<32x1xf32> to vector<32x256xf32>
    %47 = arith.addf %41, %46 : vector<32x256xf32>
    %48 = vector.extract_strided_slice %2 {offsets = [0, 3], sizes = [32, 1], strides = [1, 1]} : vector<32x4xf32> to vector<32x1xf32>
    %49 = vector.extract_strided_slice %9 {offsets = [3, 0], sizes = [1, 256], strides = [1, 1]} : vector<4x256xf32> to vector<1x256xf32>
    %50 = vector.broadcast %48 : vector<32x1xf32> to vector<32x256xf32>
    %51 = vector.broadcast %49 : vector<1x256xf32> to vector<32x256xf32>
    %52 = arith.mulf %50, %51 : vector<32x256xf32>
    %53 = arith.addf %47, %52 : vector<32x256xf32>
    %54 = vector.extract_strided_slice %3 {offsets = [0, 3], sizes = [32, 1], strides = [1, 1]} : vector<32x4xf32> to vector<32x1xf32>
    %55 = vector.extract_strided_slice %10 {offsets = [3, 0], sizes = [1, 1], strides = [1, 1]} : vector<4x1xf32> to vector<1x1xf32>
    %56 = vector.broadcast %55 : vector<1x1xf32> to vector<32x1xf32>
    %57 = arith.mulf %54, %56 : vector<32x1xf32>
    %58 = vector.broadcast %57 : vector<32x1xf32> to vector<32x256xf32>
    %59 = arith.addf %53, %58 : vector<32x256xf32>
    %60 = math.tanh %59 : vector<32x256xf32>
    %cst = arith.constant dense<0.000000e+00> : vector<1x256xf32>
    %61 = tpu.matmul %6, %60, %cst {dimension_numbers = #tpu.dot_dimension_numbers<[1], [0], [0], [1], [0, 0, 1, 1], [], []>} : vector<1x32xf32>, vector<32x256xf32>, vector<1x256xf32> -> vector<1x256xf32>
    %62 = vector.broadcast %7 : vector<1x1xf32> to vector<1x256xf32>
    %63 = arith.addf %61, %62 : vector<1x256xf32>
    %cst_17 = arith.constant dense<0xFF800000> : vector<1xf32>
    %64 = vector.multi_reduction <maximumf>, %63, %cst_17 [1] : vector<1x256xf32> to vector<1xf32>
    %65 = vector.shape_cast %64 : vector<1xf32> to vector<1x1xf32>
    %66 = vector.broadcast %65 : vector<1x1xf32> to vector<1x256xf32>
    %67 = arith.subf %63, %66 : vector<1x256xf32>
    %68 = math.exp %67 : vector<1x256xf32>
    %cst_18 = arith.constant dense<0.000000e+00> : vector<1xf32>
    %69 = vector.multi_reduction <add>, %68, %cst_18 [1] : vector<1x256xf32> to vector<1xf32>
    %70 = vector.shape_cast %69 : vector<1xf32> to vector<1x1xf32>
    %71 = tpu.reciprocal %70 {approx = true} : vector<1x1xf32> -> vector<1x1xf32>
    %72 = vector.broadcast %71 : vector<1x1xf32> to vector<1x256xf32>
    %73 = arith.mulf %68, %72 : vector<1x256xf32>
    %74 = vector.broadcast %73 : vector<1x256xf32> to vector<4x256xf32>
    %75 = arith.mulf %9, %74 : vector<4x256xf32>
    %cst_19 = arith.constant dense<0.000000e+00> : vector<4xf32>
    %76 = vector.multi_reduction <add>, %75, %cst_19 [1] : vector<4x256xf32> to vector<4xf32>
    %77 = vector.shape_cast %76 : vector<4xf32> to vector<4x1xf32>
    %78 = arith.addf %10, %77 : vector<4x1xf32>
    %c0_20 = arith.constant 0 : index
    %c0_21 = arith.constant 0 : index
    %c0_22 = arith.constant 0 : index
    %79 = vector.load %arg9[%c0_20, %c0_21, %c0_22] : memref<1x4x1xf32, #tpu.memory_space<vmem>>, vector<1x4x1xf32>
    %80 = vector.shape_cast %79 : vector<1x4x1xf32> to vector<4x1xf32>
    %81 = vector.shape_cast %78 : vector<4x1xf32> to vector<1x4x1xf32>
    tpu.vector_store %arg9[%c0_20, %c0_21, %c0_22], %81 {strides = array<i32>} : memref<1x4x1xf32, #tpu.memory_space<vmem>>, vector<1x4x1xf32>,
    return
  }
  func.func @transform_0(%arg0: i32) -> (i32, i32, i32) {
    %c0_i32 = arith.constant 0 : i32
    %c0_i32_0 = arith.constant 0 : i32
    %c0_i32_1 = arith.constant 0 : i32
    return %arg0, %c0_i32, %c0_i32_0 : i32, i32, i32
  }
  func.func @transform_1(%arg0: i32) -> (i32, i32, i32) {
    %c0_i32 = arith.constant 0 : i32
    %c0_i32_0 = arith.constant 0 : i32
    %c0_i32_1 = arith.constant 0 : i32
    return %arg0, %c0_i32, %c0_i32_0 : i32, i32, i32
  }
  func.func @transform_2(%arg0: i32) -> (i32, i32) {
    %c0_i32 = arith.constant 0 : i32
    %c0_i32_0 = arith.constant 0 : i32
    %c0_i32_1 = arith.constant 0 : i32
    return %c0_i32, %c0_i32_0 : i32, i32
  }
  func.func @transform_3(%arg0: i32) -> (i32, i32) {
    %c0_i32 = arith.constant 0 : i32
    %c0_i32_0 = arith.constant 0 : i32
    %c0_i32_1 = arith.constant 0 : i32
    return %c0_i32, %c0_i32_0 : i32, i32
  }
  func.func @transform_4(%arg0: i32) -> (i32, i32) {
    %c0_i32 = arith.constant 0 : i32
    %c0_i32_0 = arith.constant 0 : i32
    %c0_i32_1 = arith.constant 0 : i32
    return %c0_i32, %c0_i32_0 : i32, i32
  }
  func.func @transform_5(%arg0: i32) -> (i32, i32) {
    %c0_i32 = arith.constant 0 : i32
    %c0_i32_0 = arith.constant 0 : i32
    %c0_i32_1 = arith.constant 0 : i32
    return %c0_i32, %c0_i32_0 : i32, i32
  }
  func.func @transform_6(%arg0: i32) -> (i32, i32) {
    %c0_i32 = arith.constant 0 : i32
    %c0_i32_0 = arith.constant 0 : i32
    %c0_i32_1 = arith.constant 0 : i32
    return %c0_i32, %c0_i32_0 : i32, i32
  }
  func.func @transform_7(%arg0: i32) -> (i32, i32) {
    %c0_i32 = arith.constant 0 : i32
    %c0_i32_0 = arith.constant 0 : i32
    %c0_i32_1 = arith.constant 0 : i32
    return %c0_i32, %c0_i32_0 : i32, i32
  }
  func.func @transform_8(%arg0: i32) -> (i32, i32, i32) {
    %c0_i32 = arith.constant 0 : i32
    %c0_i32_0 = arith.constant 0 : i32
    %c0_i32_1 = arith.constant 0 : i32
    return %arg0, %c0_i32, %c0_i32_0 : i32, i32, i32
  }
}

</mosaic_0001>

<llo_original>
// kernel: tpu_custom_call.1
$region0: #{tpu_custom_call.1}
  #allocation0 [shape = 'u32[]', space=smem, size = 0x4, offset = 0x4, fixed_abs, tag = 'smem constant byte address 0x4 - core index']
  #allocation1 [shape = 'u32[72,128]{1,0:T(1,128)}', space=vmem, size = 0x9000, scoped, tag = 'internal scratch']
  #allocation2 [shape = 'f32[1,1]{1,0:T(1,128)S(1)}', space=vmem, size = 0x200, scoped, tag = 'scoped memory for tpu_custom_call.1']
  %s0 = inlined_call_operand.vmem [shape: f32[2,4,256], index: 0, kind: input, shape index: {}]
  %s1 = inlined_call_operand.vmem [shape: f32[2,4,1], index: 1, kind: input, shape index: {}]
  %s2 = inlined_call_operand.vmem [shape: f32[32,4], index: 2, kind: input, shape index: {}]
  %s3 = inlined_call_operand.vmem [shape: f32[32,1], index: 3, kind: input, shape index: {}]
  %s4 = inlined_call_operand.vmem [shape: f32[32,4], index: 4, kind: input, shape index: {}]
  %s5 = inlined_call_operand.vmem [shape: f32[32,1], index: 5, kind: input, shape index: {}]
  %s6 = inlined_call_operand.vmem [shape: f32[1,32], index: 6, kind: input, shape index: {}]
  %s7 = inlined_call_operand.<no memory space> [shape: f32[1,1], index: 7, kind: input, shape index: {}]
  %s8 = inlined_call_operand.vmem [shape: f32[2,4,1], index: 8, kind: output, shape index: {}]
  %s9 = sld [smem:[#allocation0]]
  $region65: #{tpu_custom_call.1} parent=0
    _
  %s11 = ssub.s32 1, %s9
  %s12 = scalar_select 0, %s11, %s9
  %v13 = vstv %s7
  %14 = vst [vmem:[#allocation2] sm:$0x1] %v13
  loop: start=0, step=1, limit=4
  $region2: #{tpu_custom_call.1} parent=0 // loop_pre_header
    _
  $region3: #{tpu_custom_call.1} parent=0 // loop_header
    %s16 = sphi 0, %s20
    %p17 = scmp.ge.s32.totalorder %s16, 4
    %s26 = sphi 0, %s28
    %s29 = sphi 0, %s26
    %s30 = sphi 0, %s29
    %s46 = sphi 0, %s30
    %s52 = sphi 0, %s54
    %s55 = sphi 0, %s52
    %s56 = sphi 0, %s55
    %s72 = sphi 0, %s56
    %s76 = sphi 0, %s76
    %s78 = sphi 0, %s76
    %s79 = sphi 0, %s78
    %s93 = sphi 0, %s79
    %s97 = sphi 0, %s97
    %s99 = sphi 0, %s97
    %s100 = sphi 0, %s99
    %s114 = sphi 0, %s100
    %s118 = sphi 0, %s118
    %s120 = sphi 0, %s118
    %s121 = sphi 0, %s120
    %s135 = sphi 0, %s121
    %s139 = sphi 0, %s139
    %s141 = sphi 0, %s139
    %s142 = sphi 0, %s141
    %s156 = sphi 0, %s142
    %s160 = sphi 0, %s160
    %s162 = sphi 0, %s160
    %s163 = sphi 0, %s162
    %s177 = sphi 0, %s163
    %s181 = sphi 0, %s181
    %s183 = sphi 0, %s181
    %s184 = sphi 0, %s183
    %s198 = sphi 0, %s184
    %s204 = sphi 0, %s206
    %s207 = sphi 0, %s204
    %s208 = sphi 0, %s207
    %s224 = sphi 0, %s208
  $region4: #{tpu_custom_call.1} parent=0 // loop_header_branch
    %19 = sbr.rel (%p17) target = $region8
  $region5: #{tpu_custom_call.1} parent=0 // loop_body
    %s21 = ssub.s32 %s16, 1
    %s22 = ssub.s32 %s16, 2
    %s23 = sadd.s32 %s16, 1
    %s24 = ssub.s32 %s16, %s23
    %p25 = scmp.eq.s32.totalorder %s24, 0
    %s27 = sadd.s32 %s26, 1
    %s28 = scalar_select %p25, %s26, %s27
    %p31 = pneg %p25
    %p32 = scmp.eq.s32.totalorder %s16, 1
    %p33 = por %p31, %p32
    %p34 = scmp.ne.s32.totalorder %s26, %s29
    %p35 = scmp.eq.s32.totalorder %s16, 0
    %p36 = por %p34, %p35
    %p37 = scmp.ne.s32.totalorder %s26, %s29
    %p38 = scmp.eq.s32.totalorder %s21, 1
    %p39 = por %p37, %p38
    %p40 = scmp.ne.s32.totalorder %s29, %s30
    %p41 = scmp.eq.s32.totalorder %s21, 0
    %p42 = por %p40, %p41
    %p43 = scmp.ne.s32.totalorder %s29, %s30
    %p44 = scmp.eq.s32.totalorder %s22, 1
    %p45 = por %p43, %p44
    %p47 = scmp.ne.s32.totalorder %s30, %s46
    %p48 = scmp.eq.s32.totalorder %s22, 0
    %p49 = por %p47, %p48
    %s50 = ssub.s32 %s16, %s23
    %p51 = scmp.eq.s32.totalorder %s50, 0
    %s53 = sadd.s32 %s52, 1
    %s54 = scalar_select %p51, %s52, %s53
    %p57 = pneg %p51
    %p58 = scmp.eq.s32.totalorder %s16, 1
    %p59 = por %p57, %p58
    %p60 = scmp.ne.s32.totalorder %s52, %s55
    %p61 = scmp.eq.s32.totalorder %s16, 0
    %p62 = por %p60, %p61
    %p63 = scmp.ne.s32.totalorder %s52, %s55
    %p64 = scmp.eq.s32.totalorder %s21, 1
    %p65 = por %p63, %p64
    %p66 = scmp.ne.s32.totalorder %s55, %s56
    %p67 = scmp.eq.s32.totalorder %s21, 0
    %p68 = por %p66, %p67
    %p69 = scmp.ne.s32.totalorder %s55, %s56
    %p70 = scmp.eq.s32.totalorder %s22, 1
    %p71 = por %p69, %p70
    %p73 = scmp.ne.s32.totalorder %s56, %s72
    %p74 = scmp.eq.s32.totalorder %s22, 0
    %p75 = por %p73, %p74
    %s77 = sadd.s32 %s76, 1
    %p80 = scmp.eq.s32.totalorder %s16, 1
    %p81 = scmp.ne.s32.totalorder %s76, %s78
    %p82 = scmp.eq.s32.totalorder %s16, 0
    %p83 = por %p81, %p82
    %p84 = scmp.ne.s32.totalorder %s76, %s78
    %p85 = scmp.eq.s32.totalorder %s21, 1
    %p86 = por %p84, %p85
    %p87 = scmp.ne.s32.totalorder %s78, %s79
    %p88 = scmp.eq.s32.totalorder %s21, 0
    %p89 = por %p87, %p88
    %p90 = scmp.ne.s32.totalorder %s78, %s79
    %p91 = scmp.eq.s32.totalorder %s22, 1
    %p92 = por %p90, %p91
    %p94 = scmp.ne.s32.totalorder %s79, %s93
    %p95 = scmp.eq.s32.totalorder %s22, 0
    %p96 = por %p94, %p95
    %s98 = sadd.s32 %s97, 1
    %p101 = scmp.eq.s32.totalorder %s16, 1
    %p102 = scmp.ne.s32.totalorder %s97, %s99
    %p103 = scmp.eq.s32.totalorder %s16, 0
    %p104 = por %p102, %p103
    %p105 = scmp.ne.s32.totalorder %s97, %s99
    %p106 = scmp.eq.s32.totalorder %s21, 1
    %p107 = por %p105, %p106
    %p108 = scmp.ne.s32.totalorder %s99, %s100
    %p109 = scmp.eq.s32.totalorder %s21, 0
    %p110 = por %p108, %p109
    %p111 = scmp.ne.s32.totalorder %s99, %s100
    %p112 = scmp.eq.s32.totalorder %s22, 1
    %p113 = por %p111, %p112
    %p115 = scmp.ne.s32.totalorder %s100, %s114
    %p116 = scmp.eq.s32.totalorder %s22, 0
    %p117 = por %p115, %p116
    %s119 = sadd.s32 %s118, 1
    %p122 = scmp.eq.s32.totalorder %s16, 1
    %p123 = scmp.ne.s32.totalorder %s118, %s120
    %p124 = scmp.eq.s32.totalorder %s16, 0
    %p125 = por %p123, %p124
    %p126 = scmp.ne.s32.totalorder %s118, %s120
    %p127 = scmp.eq.s32.totalorder %s21, 1
    %p128 = por %p126, %p127
    %p129 = scmp.ne.s32.totalorder %s120, %s121
    %p130 = scmp.eq.s32.totalorder %s21, 0
    %p131 = por %p129, %p130
    %p132 = scmp.ne.s32.totalorder %s120, %s121
    %p133 = scmp.eq.s32.totalorder %s22, 1
    %p134 = por %p132, %p133
    %p136 = scmp.ne.s32.totalorder %s121, %s135
    %p137 = scmp.eq.s32.totalorder %s22, 0
    %p138 = por %p136, %p137
    %s140 = sadd.s32 %s139, 1
    %p143 = scmp.eq.s32.totalorder %s16, 1
    %p144 = scmp.ne.s32.totalorder %s139, %s141
    %p145 = scmp.eq.s32.totalorder %s16, 0
    %p146 = por %p144, %p145
    %p147 = scmp.ne.s32.totalorder %s139, %s141
    %p148 = scmp.eq.s32.totalorder %s21, 1
    %p149 = por %p147, %p148
    %p150 = scmp.ne.s32.totalorder %s141, %s142
    %p151 = scmp.eq.s32.totalorder %s21, 0
    %p152 = por %p150, %p151
    %p153 = scmp.ne.s32.totalorder %s141, %s142
    %p154 = scmp.eq.s32.totalorder %s22, 1
    %p155 = por %p153, %p154
    %p157 = scmp.ne.s32.totalorder %s142, %s156
    %p158 = scmp.eq.s32.totalorder %s22, 0
    %p159 = por %p157, %p158
    %s161 = sadd.s32 %s160, 1
    %p164 = scmp.eq.s32.totalorder %s16, 1
    %p165 = scmp.ne.s32.totalorder %s160, %s162
    %p166 = scmp.eq.s32.totalorder %s16, 0
    %p167 = por %p165, %p166
    %p168 = scmp.ne.s32.totalorder %s160, %s162
    %p169 = scmp.eq.s32.totalorder %s21, 1
    %p170 = por %p168, %p169
    %p171 = scmp.ne.s32.totalorder %s162, %s163
    %p172 = scmp.eq.s32.totalorder %s21, 0
    %p173 = por %p171, %p172
    %p174 = scmp.ne.s32.totalorder %s162, %s163
    %p175 = scmp.eq.s32.totalorder %s22, 1
    %p176 = por %p174, %p175
    %p178 = scmp.ne.s32.totalorder %s163, %s177
    %p179 = scmp.eq.s32.totalorder %s22, 0
    %p180 = por %p178, %p179
    %s182 = sadd.s32 %s181, 1
    %p185 = scmp.eq.s32.totalorder %s16, 1
    %p186 = scmp.ne.s32.totalorder %s181, %s183
    %p187 = scmp.eq.s32.totalorder %s16, 0
    %p188 = por %p186, %p187
    %p189 = scmp.ne.s32.totalorder %s181, %s183
    %p190 = scmp.eq.s32.totalorder %s21, 1
    %p191 = por %p189, %p190
    %p192 = scmp.ne.s32.totalorder %s183, %s184
    %p193 = scmp.eq.s32.totalorder %s21, 0
    %p194 = por %p192, %p193
    %p195 = scmp.ne.s32.totalorder %s183, %s184
    %p196 = scmp.eq.s32.totalorder %s22, 1
    %p197 = por %p195, %p196
    %p199 = scmp.ne.s32.totalorder %s184, %s198
    %p200 = scmp.eq.s32.totalorder %s22, 0
    %p201 = por %p199, %p200
    %s202 = ssub.s32 %s16, %s23
    %p203 = scmp.eq.s32.totalorder %s202, 0
    %s205 = sadd.s32 %s204, 1
    %s206 = scalar_select %p203, %s204, %s205
    %p209 = pneg %p203
    %p210 = scmp.eq.s32.totalorder %s16, 1
    %p211 = por %p209, %p210
    %p212 = scmp.ne.s32.totalorder %s204, %s207
    %p213 = scmp.eq.s32.totalorder %s16, 0
    %p214 = por %p212, %p213
    %p215 = scmp.ne.s32.totalorder %s204, %s207
    %p216 = scmp.eq.s32.totalorder %s21, 1
    %p217 = por %p215, %p216
    %p218 = scmp.ne.s32.totalorder %s207, %s208
    %p219 = scmp.eq.s32.totalorder %s21, 0
    %p220 = por %p218, %p219
    %p221 = scmp.ne.s32.totalorder %s207, %s208
    %p222 = scmp.eq.s32.totalorder %s22, 1
    %p223 = por %p221, %p222
    %p225 = scmp.ne.s32.totalorder %s208, %s224
    %p226 = scmp.eq.s32.totalorder %s22, 0
    %p227 = por %p225, %p226
    %p228 = scmp.le.s32.totalorder 1, %s16
    %p229 = scmp.lt.s32.totalorder %s16, 3
    %p230 = pnand %p228, %p229
    %p231 = pneg %p230
    // Predicated region
    $region9: #{tpu_custom_call.1} parent=5 // pred_check
      _
    $region10: #{tpu_custom_call.1} parent=5 // pred_check_branch
      %233 = sbr.rel (%p230) target = $region12
    $region11: #{tpu_custom_call.1} parent=5 // pred_region
      %s234 = ssub.s32 %s16, 1
      // Predicated region
      $region13: #{tpu_custom_call.1} parent=11 // pred_check
        %p235 = pneg %p89
      $region14: #{tpu_custom_call.1} parent=11 // pred_check_branch
        %237 = sbr.rel (%p235) target = $region16
      $region15: #{tpu_custom_call.1} parent=11 // pred_region
        _
      $region16: #{tpu_custom_call.1} parent=11 // pred_fallthru
        _
      // Predicated region
      $region17: #{tpu_custom_call.1} parent=11 // pred_check
        %p238 = pneg %p110
      $region18: #{tpu_custom_call.1} parent=11 // pred_check_branch
        %240 = sbr.rel (%p238) target = $region20
      $region19: #{tpu_custom_call.1} parent=11 // pred_region
        _
      $region20: #{tpu_custom_call.1} parent=11 // pred_fallthru
        _
      // Predicated region
      $region21: #{tpu_custom_call.1} parent=11 // pred_check
        %p241 = pneg %p131
      $region22: #{tpu_custom_call.1} parent=11 // pred_check_branch
        %243 = sbr.rel (%p241) target = $region24
      $region23: #{tpu_custom_call.1} parent=11 // pred_region
        _
      $region24: #{tpu_custom_call.1} parent=11 // pred_fallthru
        _
      // Predicated region
      $region25: #{tpu_custom_call.1} parent=11 // pred_check
        %p244 = pneg %p152
      $region26: #{tpu_custom_call.1} parent=11 // pred_check_branch
        %246 = sbr.rel (%p244) target = $region28
      $region27: #{tpu_custom_call.1} parent=11 // pred_region
        _
      $region28: #{tpu_custom_call.1} parent=11 // pred_fallthru
        _
      // Predicated region
      $region29: #{tpu_custom_call.1} parent=11 // pred_check
        %p247 = pneg %p173
      $region30: #{tpu_custom_call.1} parent=11 // pred_check_branch
        %249 = sbr.rel (%p247) target = $region32
      $region31: #{tpu_custom_call.1} parent=11 // pred_region
        _
      $region32: #{tpu_custom_call.1} parent=11 // pred_fallthru
        _
      // Predicated region
      $region33: #{tpu_custom_call.1} parent=11 // pred_check
        %p250 = pneg %p194
      $region34: #{tpu_custom_call.1} parent=11 // pred_check_branch
        %252 = sbr.rel (%p250) target = $region36
      $region35: #{tpu_custom_call.1} parent=11 // pred_region
        _
      $region36: #{tpu_custom_call.1} parent=11 // pred_fallthru
        _
    $region12: #{tpu_custom_call.1} parent=5 // pred_fallthru
      _
    %p253 = scmp.lt.s32.totalorder %s16, 2
    // Predicated region
    $region37: #{tpu_custom_call.1} parent=5 // pred_check
      %p254 = pneg %p253
    $region38: #{tpu_custom_call.1} parent=5 // pred_check_branch
      %256 = sbr.rel (%p254) target = $region40
    $region39: #{tpu_custom_call.1} parent=5 // pred_region
      // Predicated region
      $region41: #{tpu_custom_call.1} parent=39 // pred_check
        %p257 = pneg %p36
      $region42: #{tpu_custom_call.1} parent=39 // pred_check_branch
        %259 = sbr.rel (%p257) target = $region44
      $region43: #{tpu_custom_call.1} parent=39 // pred_region
        %p260 = scmp.lt.s32.totalorder %s16, 1
        %s261 = scalar_select %p260, %s16, 1
        %s262 = smul.addr %s261, 2
        %s263 = smul.addr %s262, 4
        %s264 = scalar_lea.vmem %s0, %s263
      $region44: #{tpu_custom_call.1} parent=39 // pred_fallthru
        _
      // Predicated region
      $region45: #{tpu_custom_call.1} parent=39 // pred_check
        %p265 = pneg %p62
      $region46: #{tpu_custom_call.1} parent=39 // pred_check_branch
        %267 = sbr.rel (%p265) target = $region48
      $region47: #{tpu_custom_call.1} parent=39 // pred_region
        %p268 = scmp.lt.s32.totalorder %s16, 1
        %s269 = scalar_select %p268, %s16, 1
        %s270 = smul.addr %s269, 4
        %s271 = scalar_lea.vmem %s1, %s270
      $region48: #{tpu_custom_call.1} parent=39 // pred_fallthru
        _
    $region40: #{tpu_custom_call.1} parent=5 // pred_fallthru
      _
    %p272 = scmp.le.s32.totalorder 1, %s16
    %p273 = scmp.lt.s32.totalorder %s16, 3
    %p274 = pnand %p272, %p273
    %p275 = pneg %p274
    // Predicated region
    $region49: #{tpu_custom_call.1} parent=5 // pred_check
      _
    $region50: #{tpu_custom_call.1} parent=5 // pred_check_branch
      %277 = sbr.rel (%p274) target = $region52
    $region51: #{tpu_custom_call.1} parent=5 // pred_region
      %s278 = ssub.s32 %s16, 1
      %p279 = scmp.lt.s32.totalorder %s21, 1
      %s280 = scalar_select %p279, %s21, 1
      %s281 = smul.addr %s280, 2
      %s282 = smul.addr %s281, 4
      %s283 = scalar_lea.vmem %s0, %s282
      %p284 = pneg %p42
      %p285 = pneg %p39
      %p286 = scmp.lt.s32.totalorder %s21, 1
      %s287 = scalar_select %p286, %s21, 1
      %s288 = smul.addr %s287, 4
      %s289 = scalar_lea.vmem %s1, %s288
      %p290 = pneg %p68
      %p291 = pneg %p65
      %p292 = pneg %p89
      %p293 = pneg %p86
      %p294 = pneg %p110
      %p295 = pneg %p107
      %p296 = pneg %p131
      %p297 = pneg %p128
      %p298 = pneg %p152
      %p299 = pneg %p149
      %p300 = pneg %p173
      %p301 = pneg %p170
      %p302 = pneg %p194
      %p303 = pneg %p191
      %p304 = pneg %p220
      %p305 = pneg %p217
      %p306 = scmp.lt.s32.totalorder %s21, 1
      %s307 = scalar_select %p306, %s21, 1
      %s308 = smul.addr %s307, 4
      %s309 = scalar_lea.vmem %s8, %s308
      %p310 = scmp.lt.s32.totalorder %s21, 1
      %s311 = scalar_select %p310, %s21, 1
      %s312 = smul.addr %s311, 2
      %s313 = smul.addr %s312, 4
      %s314 = scalar_lea.vmem %s0, %s313
      %p315 = scmp.lt.s32.totalorder %s21, 1
      %s316 = scalar_select %p315, %s21, 1
      %s317 = smul.addr %s316, 4
      %s318 = scalar_lea.vmem %s1, %s317
      %p319 = scmp.lt.s32.totalorder %s21, 1
      %s320 = scalar_select %p319, %s21, 1
      %s321 = smul.addr %s320, 4
      %s322 = scalar_lea.vmem %s8, %s321
      %v323 = vld [vmem:[%s314] sm:$0xff]
      %v324 = vld [vmem:[%s318] sm:$0xf]
      %v325 = vld [vmem:[%s2] sm:$0xff]
      %v326 = vld [vmem:[%s2 + $0x8] sm:$0xff]
      %v327 = vld [vmem:[%s2 + $0x10] sm:$0xff]
      %v328 = vld [vmem:[%s2 + $0x18] sm:$0xff]
      %v329 = vld [vmem:[%s4] sm:$0xff]
      %v330 = vld [vmem:[%s4 + $0x8] sm:$0xff]
      %v331 = vld [vmem:[%s4 + $0x10] sm:$0xff]
      %v332 = vld [vmem:[%s4 + $0x18] sm:$0xff]
      %v333 = vld [vmem:[%s3] sm:$0xff]
      %v334 = vld [vmem:[%s3 + $0x8] sm:$0xff]
      %v335 = vld [vmem:[%s3 + $0x10] sm:$0xff]
      %v336 = vld [vmem:[%s3 + $0x18] sm:$0xff]
      %v337 = vld [vmem:[%s5] sm:$0xff]
      %v338 = vld [vmem:[%s5 + $0x8] sm:$0xff]
      %v339 = vld [vmem:[%s5 + $0x10] sm:$0xff]
      %v340 = vld [vmem:[%s5 + $0x18] sm:$0xff]
      %v341 = vld [vmem:[%s6] sm:$0x1]
      %v342 = vld [vmem:[#allocation2] sm:$0x1]
      %v343 = vadd.f32 %v333, %v337
      %v344 = vadd.f32 %v334, %v338
      %v345 = vadd.f32 %v335, %v339
      %v346 = vadd.f32 %v336, %v340
      %348 = vset.pattern.permute.xlu0 0
      %349 = vperm.xlu0 %348, %v325
      %v350 = vpop.permute.xlu0 %349
      %353 = vset.pattern.permute.xlu0 0
      %354 = vperm.xlu0 %353, %v326
      %v355 = vpop.permute.xlu0 %354
      %358 = vset.pattern.permute.xlu0 0
      %359 = vperm.xlu0 %358, %v327
      %v360 = vpop.permute.xlu0 %359
      %363 = vset.pattern.permute.xlu0 0
      %364 = vperm.xlu0 %363, %v328
      %v365 = vpop.permute.xlu0 %364
      %v368 = vperm.slane %v323, 0
      %v369 = vperm.slane %v323, 4
      %v372 = vperm.slane %v368, 0
      %v373 = vperm.slane %v369, 0
      %v374 = vmul.f32 %v350, %v372
      %v375 = vmul.f32 %v350, %v373
      %v376 = vmul.f32 %v355, %v372
      %v377 = vmul.f32 %v355, %v373
      %v378 = vmul.f32 %v360, %v372
      %v379 = vmul.f32 %v360, %v373
      %v380 = vmul.f32 %v365, %v372
      %v381 = vmul.f32 %v365, %v373
      %383 = vset.pattern.permute.xlu0 0
      %384 = vperm.xlu0 %383, %v343
      %v385 = vpop.permute.xlu0 %384
      %388 = vset.pattern.permute.xlu0 0
      %389 = vperm.xlu0 %388, %v344
      %v390 = vpop.permute.xlu0 %389
      %393 = vset.pattern.permute.xlu0 0
      %394 = vperm.xlu0 %393, %v345
      %v395 = vpop.permute.xlu0 %394
      %398 = vset.pattern.permute.xlu0 0
      %399 = vperm.xlu0 %398, %v346
      %v400 = vpop.permute.xlu0 %399
      %v402 = vadd.f32 %v385, %v374
      %v403 = vadd.f32 %v385, %v375
      %v404 = vadd.f32 %v390, %v376
      %v405 = vadd.f32 %v390, %v377
      %v406 = vadd.f32 %v395, %v378
      %v407 = vadd.f32 %v395, %v379
      %v408 = vadd.f32 %v400, %v380
      %v409 = vadd.f32 %v400, %v381
      %v410 = vperm.slane %v324, 0
      %v411 = vmul.f32 %v329, %v410
      %v412 = vmul.f32 %v330, %v410
      %v413 = vmul.f32 %v331, %v410
      %v414 = vmul.f32 %v332, %v410
      %416 = vset.pattern.permute.xlu0 0
      %417 = vperm.xlu0 %416, %v411
      %v418 = vpop.permute.xlu0 %417
      %421 = vset.pattern.permute.xlu0 0
      %422 = vperm.xlu0 %421, %v412
      %v423 = vpop.permute.xlu0 %422
      %426 = vset.pattern.permute.xlu0 0
      %427 = vperm.xlu0 %426, %v413
      %v428 = vpop.permute.xlu0 %427
      %431 = vset.pattern.permute.xlu0 0
      %432 = vperm.xlu0 %431, %v414
      %v433 = vpop.permute.xlu0 %432
      %v435 = vadd.f32 %v402, %v418
      %v436 = vadd.f32 %v403, %v418
      %v437 = vadd.f32 %v404, %v423
      %v438 = vadd.f32 %v405, %v423
      %v439 = vadd.f32 %v406, %v428
      %v440 = vadd.f32 %v407, %v428
      %v441 = vadd.f32 %v408, %v433
      %v442 = vadd.f32 %v409, %v433
      %443 = vset.pattern.permute.xlu0 1
      %444 = vperm.xlu0 %443, %v325
      %v445 = vpop.permute.xlu0 %444
      %447 = vset.pattern.permute.xlu0 1
      %448 = vperm.xlu0 %447, %v326
      %v449 = vpop.permute.xlu0 %448
      %451 = vset.pattern.permute.xlu0 1
      %452 = vperm.xlu0 %451, %v327
      %v453 = vpop.permute.xlu0 %452
      %455 = vset.pattern.permute.xlu0 1
      %456 = vperm.xlu0 %455, %v328
      %v457 = vpop.permute.xlu0 %456
      %v459 = vperm.slane %v323, 1
      %v460 = vperm.slane %v323, 5
      %v463 = vperm.slane %v459, 1
      %v464 = vperm.slane %v460, 1
      %v465 = vmul.f32 %v445, %v463
      %v466 = vmul.f32 %v445, %v464
      %v467 = vmul.f32 %v449, %v463
      %v468 = vmul.f32 %v449, %v464
      %v469 = vmul.f32 %v453, %v463
      %v470 = vmul.f32 %v453, %v464
      %v471 = vmul.f32 %v457, %v463
      %v472 = vmul.f32 %v457, %v464
      %v473 = vadd.f32 %v435, %v465
      %v474 = vadd.f32 %v436, %v466
      %v475 = vadd.f32 %v437, %v467
      %v476 = vadd.f32 %v438, %v468
      %v477 = vadd.f32 %v439, %v469
      %v478 = vadd.f32 %v440, %v470
      %v479 = vadd.f32 %v441, %v471
      %v480 = vadd.f32 %v442, %v472
      %v481 = vperm.slane %v324, 1
      %483 = vrot.lane.b32.xlu0 %v481, 1
      %v484 = vpop.permute.xlu0 %483
      %v486 = vmul.f32 %v329, %v484
      %v487 = vmul.f32 %v330, %v484
      %v488 = vmul.f32 %v331, %v484
      %v489 = vmul.f32 %v332, %v484
      %491 = vset.pattern.permute.xlu0 1
      %492 = vperm.xlu0 %491, %v486
      %v493 = vpop.permute.xlu0 %492
      %496 = vset.pattern.permute.xlu0 1
      %497 = vperm.xlu0 %496, %v487
      %v498 = vpop.permute.xlu0 %497
      %501 = vset.pattern.permute.xlu0 1
      %502 = vperm.xlu0 %501, %v488
      %v503 = vpop.permute.xlu0 %502
      %506 = vset.pattern.permute.xlu0 1
      %507 = vperm.xlu0 %506, %v489
      %v508 = vpop.permute.xlu0 %507
      %v510 = vadd.f32 %v473, %v493
      %v511 = vadd.f32 %v474, %v493
      %v512 = vadd.f32 %v475, %v498
      %v513 = vadd.f32 %v476, %v498
      %v514 = vadd.f32 %v477, %v503
      %v515 = vadd.f32 %v478, %v503
      %v516 = vadd.f32 %v479, %v508
      %v517 = vadd.f32 %v480, %v508
      %518 = vset.pattern.permute.xlu0 2
      %519 = vperm.xlu0 %518, %v325
      %v520 = vpop.permute.xlu0 %519
      %522 = vset.pattern.permute.xlu0 2
      %523 = vperm.xlu0 %522, %v326
      %v524 = vpop.permute.xlu0 %523
      %526 = vset.pattern.permute.xlu0 2
      %527 = vperm.xlu0 %526, %v327
      %v528 = vpop.permute.xlu0 %527
      %530 = vset.pattern.permute.xlu0 2
      %531 = vperm.xlu0 %530, %v328
      %v532 = vpop.permute.xlu0 %531
      %v534 = vperm.slane %v323, 2
      %v535 = vperm.slane %v323, 6
      %v538 = vperm.slane %v534, 2
      %v539 = vperm.slane %v535, 2
      %v540 = vmul.f32 %v520, %v538
      %v541 = vmul.f32 %v520, %v539
      %v542 = vmul.f32 %v524, %v538
      %v543 = vmul.f32 %v524, %v539
      %v544 = vmul.f32 %v528, %v538
      %v545 = vmul.f32 %v528, %v539
      %v546 = vmul.f32 %v532, %v538
      %v547 = vmul.f32 %v532, %v539
      %v548 = vadd.f32 %v510, %v540
      %v549 = vadd.f32 %v511, %v541
      %v550 = vadd.f32 %v512, %v542
      %v551 = vadd.f32 %v513, %v543
      %v552 = vadd.f32 %v514, %v544
      %v553 = vadd.f32 %v515, %v545
      %v554 = vadd.f32 %v516, %v546
      %v555 = vadd.f32 %v517, %v547
      %v556 = vperm.slane %v324, 2
      %558 = vrot.lane.b32.xlu0 %v556, 2
      %v559 = vpop.permute.xlu0 %558
      %v561 = vmul.f32 %v329, %v559
      %v562 = vmul.f32 %v330, %v559
      %v563 = vmul.f32 %v331, %v559
      %v564 = vmul.f32 %v332, %v559
      %566 = vset.pattern.permute.xlu0 2
      %567 = vperm.xlu0 %566, %v561
      %v568 = vpop.permute.xlu0 %567
      %571 = vset.pattern.permute.xlu0 2
      %572 = vperm.xlu0 %571, %v562
      %v573 = vpop.permute.xlu0 %572
      %576 = vset.pattern.permute.xlu0 2
      %577 = vperm.xlu0 %576, %v563
      %v578 = vpop.permute.xlu0 %577
      %581 = vset.pattern.permute.xlu0 2
      %582 = vperm.xlu0 %581, %v564
      %v583 = vpop.permute.xlu0 %582
      %v585 = vadd.f32 %v548, %v568
      %v586 = vadd.f32 %v549, %v568
      %v587 = vadd.f32 %v550, %v573
      %v588 = vadd.f32 %v551, %v573
      %v589 = vadd.f32 %v552, %v578
      %v590 = vadd.f32 %v553, %v578
      %v591 = vadd.f32 %v554, %v583
      %v592 = vadd.f32 %v555, %v583
      %593 = vset.pattern.permute.xlu0 3
      %594 = vperm.xlu0 %593, %v325
      %v595 = vpop.permute.xlu0 %594
      %597 = vset.pattern.permute.xlu0 3
      %598 = vperm.xlu0 %597, %v326
      %v599 = vpop.permute.xlu0 %598
      %601 = vset.pattern.permute.xlu0 3
      %602 = vperm.xlu0 %601, %v327
      %v603 = vpop.permute.xlu0 %602
      %605 = vset.pattern.permute.xlu0 3
      %606 = vperm.xlu0 %605, %v328
      %v607 = vpop.permute.xlu0 %606
      %v609 = vperm.slane %v323, 3
      %v610 = vperm.slane %v323, 7
      %v613 = vperm.slane %v609, 3
      %v614 = vperm.slane %v610, 3
      %v615 = vmul.f32 %v595, %v613
      %v616 = vmul.f32 %v595, %v614
      %v617 = vmul.f32 %v599, %v613
      %v618 = vmul.f32 %v599, %v614
      %v619 = vmul.f32 %v603, %v613
      %v620 = vmul.f32 %v603, %v614
      %v621 = vmul.f32 %v607, %v613
      %v622 = vmul.f32 %v607, %v614
      %v623 = vadd.f32 %v585, %v615
      %v624 = vadd.f32 %v586, %v616
      %v625 = vadd.f32 %v587, %v617
      %v626 = vadd.f32 %v588, %v618
      %v627 = vadd.f32 %v589, %v619
      %v628 = vadd.f32 %v590, %v620
      %v629 = vadd.f32 %v591, %v621
      %v630 = vadd.f32 %v592, %v622
      %v631 = vperm.slane %v324, 3
      %633 = vrot.lane.b32.xlu0 %v631, 3
      %v634 = vpop.permute.xlu0 %633
      %v636 = vmul.f32 %v329, %v634
      %v637 = vmul.f32 %v330, %v634
      %v638 = vmul.f32 %v331, %v634
      %v639 = vmul.f32 %v332, %v634
      %641 = vset.pattern.permute.xlu0 3
      %642 = vperm.xlu0 %641, %v636
      %v643 = vpop.permute.xlu0 %642
      %646 = vset.pattern.permute.xlu0 3
      %647 = vperm.xlu0 %646, %v637
      %v648 = vpop.permute.xlu0 %647
      %651 = vset.pattern.permute.xlu0 3
      %652 = vperm.xlu0 %651, %v638
      %v653 = vpop.permute.xlu0 %652
      %656 = vset.pattern.permute.xlu0 3
      %657 = vperm.xlu0 %656, %v639
      %v658 = vpop.permute.xlu0 %657
      %v660 = vadd.f32 %v623, %v643
      %v661 = vadd.f32 %v624, %v643
      %v662 = vadd.f32 %v625, %v648
      %v663 = vadd.f32 %v626, %v648
      %v664 = vadd.f32 %v627, %v653
      %v665 = vadd.f32 %v628, %v653
      %v666 = vadd.f32 %v629, %v658
      %v667 = vadd.f32 %v630, %v658
      %v668 = vtanh.pop %v660
      %v669 = vtanh.pop %v661
      %v670 = vtanh.pop %v662
      %v671 = vtanh.pop %v663
      %v672 = vtanh.pop %v664
      %v673 = vtanh.pop %v665
      %v674 = vtanh.pop %v666
      %v675 = vtanh.pop %v667
      %677 = vset.pattern.permute.xlu0 0
      %678 = vperm.xlu0 %677, %v342
      %v679 = vpop.permute.xlu0 %678
      %v681 = vperm.slane %v679, 0
      %vm682 = vcmask 261120
      %v684 = vsel %vm682, %v341, 0
      %686 = vmatpush.msra.mxu0 0.0
      %687 = vmatpush.msra.mxu0 0.0
      %688 = vmatpush.msra.mxu0 0.0
      %689 = vmatpush.msra.mxu0 0.0
      %690 = vmatpush.msra.mxu0 0.0
      %691 = vmatpush.msra.mxu0 0.0
      %692 = vmatpush.msra.mxu0 0.0
      %693 = vmatpush.msra.mxu0 0.0
      %694 = vmatpush.msra.mxu0 0.0
      %695 = vmatpush.msra.mxu0 0.0
      %696 = vmatpush.msra.mxu0 0.0
      %697 = vmatpush.msra.mxu0 0.0
      %698 = vmatpush.msra.mxu0 %v674
      %699 = vmatpush.msra.mxu0 %v672
      %700 = vmatpush.msra.mxu0 %v670
      %701 = vmatpush.msra.mxu0 %v668
      %702 = vmatmul.f32.gmra.mxu0 %v684
      %v703 = vpop.f32.mrf.mxu0
      %v704 = vadd.f32 %v681, %v703
      %705 = vdwg.mxu0
      %706 = vmatpush.msra.mxu0 0.0
      %707 = vmatpush.msra.mxu0 0.0
      %708 = vmatpush.msra.mxu0 0.0
      %709 = vmatpush.msra.mxu0 0.0
      %710 = vmatpush.msra.mxu0 0.0
      %711 = vmatpush.msra.mxu0 0.0
      %712 = vmatpush.msra.mxu0 0.0
      %713 = vmatpush.msra.mxu0 0.0
      %714 = vmatpush.msra.mxu0 0.0
      %715 = vmatpush.msra.mxu0 0.0
      %716 = vmatpush.msra.mxu0 0.0
      %717 = vmatpush.msra.mxu0 0.0
      %718 = vmatpush.msra.mxu0 %v675
      %719 = vmatpush.msra.mxu0 %v673
      %720 = vmatpush.msra.mxu0 %v671
      %721 = vmatpush.msra.mxu0 %v669
      %722 = vmatmul.f32.gmra.mxu0 %v684
      %v723 = vpop.f32.mrf.mxu0
      %v724 = vadd.f32 %v681, %v723
      %725 = vdwg.mxu0
      %vm726 = vcmask 1040384
      %v727 = vsel %vm726, %v704, -inf
      %v728 = vsel %vm726, %v724, -inf
      %v729 = vmax.f32 %v727, %v728
      %730 = vmax.xlane.f32.xlu0 %v729
      %v731 = vpop.xlane.xlu0 %730
      %v732 = vsub.f32 %v704, %v731
      %v733 = vsub.f32 %v724, %v731
      %v734 = vmul.f32 %v732, 1.442695
      %v735 = vpow.pop %v734
      %v736 = vmul.f32 %v733, 1.442695
      %v737 = vpow.pop %v736
      %v738 = vsel %vm726, %v735, 0.0
      %v739 = vsel %vm726, %v737, 0.0
      %v740 = vadd.f32 %v738, %v739
      %741 = vadd.xlane.f32.xlu0 %v740
      %v742 = vpop.xlane.xlu0 %741
      %v743 = vrcp.pop %v742
      %v744 = vmul.f32 %v735, %v743
      %v745 = vmul.f32 %v737, %v743
      %v746 = vperm.slane %v744, 0
      %v747 = vperm.slane %v745, 0
      %v750 = vrot.slane %v747, 4
      %vm751 = vcmask 1043456
      %v752 = vsel %vm751, %v746, %v750
      %v754 = vmul.f32 %v323, %v752
      %756 = vst [vmem:[#allocation1] ss:$2 sm:$0xff] %v754
      %v757 = vld.sshfl [vmem:[#allocation1] sm:$0xff pattern:$0x75316420]
      %v758 = vld.sshfl [vmem:[#allocation1 + $0x8] sm:$0xff pattern:$0x75316420]
      %v761 = vsel %vm751, %v757, 0.0
      %v762 = vsel %vm751, %v758, 0.0
      %v763 = vadd.f32 %v761, %v762
      %764 = vadd.xlane.f32.xlu0 %v763
      %v765 = vpop.xlane.xlu0 %764
      %v766 = vadd.f32 %v324, %v765
      %vm767 = vcmask 3072
      %768 = vst.msk [vmem:[%s322] sm:$0xf] %vm767, %v766
      %p769 = scmp.lt.s32.totalorder %s21, 1
      %s770 = scalar_select %p769, %s21, 1
      %s771 = smul.addr %s770, 4
      %s772 = scalar_lea.vmem %s8, %s771
      // Predicated region
      $region53: #{tpu_custom_call.1} parent=51 // pred_check
        %p773 = pneg %p217
      $region54: #{tpu_custom_call.1} parent=51 // pred_check_branch
        %775 = sbr.rel (%p773) target = $region56
      $region55: #{tpu_custom_call.1} parent=51 // pred_region
        _
      $region56: #{tpu_custom_call.1} parent=51 // pred_fallthru
        _
    $region52: #{tpu_custom_call.1} parent=5 // pred_fallthru
      _
    %p776 = scmp.le.s32.totalorder 2, %s16
    // Predicated region
    $region57: #{tpu_custom_call.1} parent=5 // pred_check
      %p777 = pneg %p776
    $region58: #{tpu_custom_call.1} parent=5 // pred_check_branch
      %779 = sbr.rel (%p777) target = $region60
    $region59: #{tpu_custom_call.1} parent=5 // pred_region
      %s780 = ssub.s32 %s16, 2
      // Predicated region
      $region61: #{tpu_custom_call.1} parent=59 // pred_check
        %p781 = pneg %p223
      $region62: #{tpu_custom_call.1} parent=59 // pred_check_branch
        %783 = sbr.rel (%p781) target = $region64
      $region63: #{tpu_custom_call.1} parent=59 // pred_region
        %p784 = scmp.lt.s32.totalorder %s22, 1
        %s785 = scalar_select %p784, %s22, 1
        %s786 = smul.addr %s785, 4
        %s787 = scalar_lea.vmem %s8, %s786
      $region64: #{tpu_custom_call.1} parent=59 // pred_fallthru
        _
    $region60: #{tpu_custom_call.1} parent=5 // pred_fallthru
      _
  $region6: #{tpu_custom_call.1} parent=0 // loop_footer
    %s20 = sadd.s32 1, %s16
  $region7: #{tpu_custom_call.1} parent=0 // loop_footer_branch
    %15 = sbr.rel target = $region3
  $region8: #{tpu_custom_call.1} parent=0 // loop_exit
    _

</llo_original>
